<compile_context>
chip_gen: v6e
topology: v6e:2x2x1
jax: 0.10.0
libtpu: 0.0.40
codegen_flags: <defaults>
</compile_context>

<pallas_src>
import math

import jax
import jax.numpy as jnp
from jax.experimental import pallas as pl
from jax.experimental.pallas import tpu as pltpu

_LANES = 128


def vdn_sum_kernel(q_ref, out_ref):
    """Reduce the agent axis of one batch tile.

    q_ref:   VMEM tile (n_agents, TB, 128)
    out_ref: VMEM tile (TB, 128)
    Single VPU reduction + single full-width store per tile; f32 accumulation.
    """
    out_ref[...] = jnp.sum(q_ref[...].astype(jnp.float32), axis=0).astype(out_ref.dtype)


def vdn_forward(q_values):
    """Sum q_values over dim 0 (agents) with a Pallas TPU kernel.

    Accepts (n_agents, *feature_dims); returns an array of shape feature_dims.
    """
    n_agents = q_values.shape[0]
    out_shape = q_values.shape[1:]
    total = math.prod(out_shape) if out_shape else 1
    dtype = q_values.dtype
    itemsize = jnp.dtype(dtype).itemsize

    # --- layout plumbing: flatten features and make the last dim lane-dense ---
    flat = q_values.reshape(n_agents, total)
    pad = (-total) % _LANES
    if pad:
        flat = jnp.pad(flat, ((0, 0), (0, pad)))
    padded_total = total + pad
    rows = padded_total // _LANES
    x = flat.reshape(n_agents, rows, _LANES)

    # --- tile size: as large as fits a conservative VMEM budget (v7x-safe) ---
    # per grid step ~ 2 * (n_agents + 1) * TB * 128 * itemsize  (double-buffered)
    vmem_budget = 16 * 1024 * 1024  # well under the 32 MiB scoped default on v7x
    max_tb = max(8, vmem_budget // (2 * (n_agents + 1) * _LANES * itemsize))
    tb_cap = 1024                   # measured sweet spot for mem-bound tiles
    if rows >= 8:
        tb = min(rows, tb_cap, (max_tb // 8) * 8)
    else:
        tb = rows                   # block dim == full array dim is always legal

    grid = (pl.cdiv(rows, tb),)

    out_flat = pl.pallas_call(
        vdn_sum_kernel,
        out_shape=jax.ShapeDtypeStruct((rows, _LANES), dtype),
        grid_spec=pltpu.PrefetchScalarGridSpec(
            num_scalar_prefetch=0,
            grid=grid,
            in_specs=[
                # Whole agent axis + one batch-row tile per grid step.
                pl.BlockSpec((n_agents, tb, _LANES), lambda b: (0, b, 0)),
            ],
            out_specs=pl.BlockSpec((tb, _LANES), lambda b: (b, 0)),
        ),
        compiler_params=pltpu.CompilerParams(
            # Batch tiles are independent: shard across TensorCores (v7x has 2).
            dimension_semantics=("parallel",),
        ),
    )(x)

    out = out_flat.reshape(-1)[:total].reshape(out_shape)
    return out


if __name__ == "__main__":
    # VDN has no parameters (its __init__ defines none) — nothing to initialize.
    key = jax.random.PRNGKey(0)

    N_AGENTS, BATCH, N_ACTIONS = 4, 8, 32
    q_values = jax.random.normal(key, (N_AGENTS, BATCH, N_ACTIONS),
                                 dtype=jnp.float32)

    out = vdn_forward(q_values)
    out = jax.block_until_ready(out)

    # Correctness check against plain-JAX reference (== torch's sum(dim=0)).
    ref = jnp.sum(q_values, axis=0)
    assert out.shape == (BATCH, N_ACTIONS), out.shape
    assert jnp.allclose(out, ref, atol=1e-6, rtol=1e-6), "mismatch vs reference"

    print("KERNEL_OK")
</pallas_src>

<mosaic_0001>
module attributes {stable_mosaic.version = 11 : i64} {
  func.func @vdn_sum_kernel(%arg0: i32, %arg1: memref<4x2x128xf32, #tpu.memory_space<vmem>>, %arg2: memref<2x128xf32, #tpu.memory_space<vmem>>) attributes {dimension_semantics = [#tpu.dimension_semantics<parallel>], iteration_bounds = array<i64: 1>, scalar_prefetch = 0 : i64, scratch_operands = 0 : i64, tpu.core_type = #tpu.core_type<tc>, window_params = [{transform_indices = @transform_0, window_bounds = array<i64: 4, 2, 128>}, {transform_indices = @transform_1, window_bounds = array<i64: 2, 128>}]} {
    %c0 = arith.constant 0 : index
    %c0_0 = arith.constant 0 : index
    %c0_1 = arith.constant 0 : index
    %0 = vector.load %arg1[%c0, %c0_0, %c0_1] : memref<4x2x128xf32, #tpu.memory_space<vmem>>, vector<4x2x128xf32>
    %cst = arith.constant dense<0.000000e+00> : vector<2x128xf32>
    %1 = vector.multi_reduction <add>, %0, %cst [0] : vector<4x2x128xf32> to vector<2x128xf32>
    %c0_2 = arith.constant 0 : index
    %c0_3 = arith.constant 0 : index
    %2 = vector.load %arg2[%c0_2, %c0_3] : memref<2x128xf32, #tpu.memory_space<vmem>>, vector<2x128xf32>
    tpu.vector_store %arg2[%c0_2, %c0_3], %1 {strides = array<i32>} : memref<2x128xf32, #tpu.memory_space<vmem>>, vector<2x128xf32>,
    return
  }
  func.func @transform_0(%arg0: i32) -> (i32, i32, i32) {
    %c0_i32 = arith.constant 0 : i32
    %c0_i32_0 = arith.constant 0 : i32
    %c0_i32_1 = arith.constant 0 : i32
    return %c0_i32, %arg0, %c0_i32_0 : i32, i32, i32
  }
  func.func @transform_1(%arg0: i32) -> (i32, i32) {
    %c0_i32 = arith.constant 0 : i32
    %c0_i32_0 = arith.constant 0 : i32
    return %arg0, %c0_i32 : i32, i32
  }
}

</mosaic_0001>

<llo_original>
// kernel: tpu_custom_call.1
$region0: #{tpu_custom_call.1}
  #allocation0 [shape = 'u32[]', space=smem, size = 0x4, offset = 0x4, fixed_abs, tag = 'smem constant byte address 0x4 - core index']
  #allocation1 [shape = 'u32[144,128]{1,0:T(1,128)}', space=vmem, size = 0x12000, scoped, tag = 'internal scratch']
  %s0 = inlined_call_operand.hbm [shape: f32[4,2,128], index: 0, kind: input, shape index: {}]
  %s1 = inlined_call_operand.hbm [shape: f32[2,128], index: 1, kind: output, shape index: {}]
  %s2 = sld [smem:[#allocation0]]
  $region18: #{tpu_custom_call.1} parent=0
    _
  %s4 = ssub.s32 1, %s2
  %s5 = scalar_select 0, %s4, %s2
  $region1: #{tpu_custom_call.1} parent=0
    #allocation2 [shape = 'u8[4096]{0}', space=vmem, size = 0x1000, scoped, tag = 'input window, operand 0, single buffered']
    #allocation3 [shape = 's32[1]{0}', space=sflag, size = 0x4, scoped, tag = 'scoped memory for tpu_custom_call.1']
    #allocation4 [shape = 's32[1]{0}', space=sflag, size = 0x4, scoped, tag = 'scoped memory for tpu_custom_call.1']
    #allocation5 [shape = 'u8[1024]{0}', space=vmem, size = 0x400, scoped, tag = 'output window, operand 0, single buffered']
    %6 = vsyncpa [#allocation3], 0
    %7 = vsyncpa [#allocation4], 0
    // Predicated region
    $region2: #{tpu_custom_call.1} parent=1 // pred_check
      _
    $region3: #{tpu_custom_call.1} parent=1 // pred_check_branch
      %9 = sbr.rel (0) target = $region5
    $region4: #{tpu_custom_call.1} parent=1 // pred_region
      %s11 = ssub.s32 128, 128
      %12 = vsyncadd [#allocation3], %s11
      %s13 = sshll.u32 [#allocation2], 4
      %s14 = int_to_ptr.vmem [resolvable:$true] %s13
      %19 = dma.hbm_to_vmem [thread:$0]  %s0, 128, %s14, [#allocation3], 32, 32, 2
    $region5: #{tpu_custom_call.1} parent=1 // pred_fallthru
      _
    // Predicated region
    $region6: #{tpu_custom_call.1} parent=1 // pred_check
      _
    $region7: #{tpu_custom_call.1} parent=1 // pred_check_branch
      %21 = sbr.rel (0) target = $region9
    $region8: #{tpu_custom_call.1} parent=1 // pred_region
      %22 = dma.done [#allocation3], 128
    $region9: #{tpu_custom_call.1} parent=1 // pred_fallthru
      _
    %v23 = vld [vmem:[#allocation2] sm:$0x3]
    %v24 = vld [vmem:[#allocation2 + $0x2] sm:$0x3]
    %v25 = vld [vmem:[#allocation2 + $0x4] sm:$0x3]
    %v26 = vld [vmem:[#allocation2 + $0x6] sm:$0x3]
    %vm27 = vcmask 1041408
    %v28 = vsel %vm27, %v23, 0.0
    %v29 = vsel %vm27, %v24, 0.0
    %v30 = vadd.f32 %v28, %v29
    %v31 = vsel %vm27, %v25, 0.0
    %v32 = vadd.f32 %v30, %v31
    %v33 = vsel %vm27, %v26, 0.0
    %v34 = vadd.f32 %v32, %v33
    %35 = vst [vmem:[#allocation5] sm:$0x3] %v34
    // Predicated region
    $region10: #{tpu_custom_call.1} parent=1 // pred_check
      _
    $region11: #{tpu_custom_call.1} parent=1 // pred_check_branch
      %37 = sbr.rel (0) target = $region13
    $region12: #{tpu_custom_call.1} parent=1 // pred_region
      %s39 = ssub.s32 32, 32
      %40 = vsyncadd [#allocation4], %s39
      %s42 = sshll.u32 [#allocation5], 4
      %s43 = int_to_ptr.vmem [resolvable:$true] %s42
      %45 = dma.vmem_to_hbm [thread:$0]  %s43, 32, %s1, [#allocation4]
    $region13: #{tpu_custom_call.1} parent=1 // pred_fallthru
      _
    // Predicated region
    $region14: #{tpu_custom_call.1} parent=1 // pred_check
      _
    $region15: #{tpu_custom_call.1} parent=1 // pred_check_branch
      %47 = sbr.rel (0) target = $region17
    $region16: #{tpu_custom_call.1} parent=1 // pred_region
      %48 = dma.done [#allocation4], 32
    $region17: #{tpu_custom_call.1} parent=1 // pred_fallthru
      _
    %49 = vsyncpa [#allocation3], 1
    %50 = vsyncpa [#allocation4], 1

</llo_original>
